<compile_context>
chip_gen: v7x
topology: tpu7x:2x2x1
jax: 0.10.0
libtpu: 0.0.40
codegen_flags: <defaults>
</compile_context>

<pallas_src>
import math

import jax
import jax.numpy as jnp
from jax.experimental import pallas as pl
from jax.experimental.pallas import tpu as pltpu


# --------------------------- GraphConv layer kernel ---------------------------

def _graphconv_kernel(adj_ref, hk_ref, hi_ref, wrel_ref, wroot_ref, b_ref,
                      out_ref, acc_ref):
    """One (row-tile, k-tile) step of out = relu((A @ h) @ W_rel + h @ W_root + b)."""
    k = pl.program_id(1)

    @pl.when(k == 0)
    def _():
        acc_ref[...] = jnp.zeros_like(acc_ref)

    # Neighbor-sum aggregation: acc[i_tile] += A[i_tile, k_tile] @ h[k_tile].
    # adj streams as bf16 (lossless for small integer edge counts); accumulate f32.
    acc_ref[...] += jnp.dot(adj_ref[...].astype(jnp.float32), hk_ref[...],
                            preferred_element_type=jnp.float32)

    @pl.when(k == pl.num_programs(1) - 1)
    def _():
        out = (jnp.dot(acc_ref[...], wrel_ref[...], preferred_element_type=jnp.float32)
               + jnp.dot(hi_ref[...], wroot_ref[...], preferred_element_type=jnp.float32)
               + b_ref[...])
        out_ref[...] = jnp.maximum(out, 0.0)


def _graphconv_pool_lin_kernel(adj_ref, hk_ref, hi_ref, wrel_ref, wroot_ref,
                               b_ref, mask_ref, wl_ref, bl_ref, out_ref,
                               acc_ref, pool_ref):
    """Last GraphConv fused with global_max_pool (running max) + final Linear."""
    i = pl.program_id(0)
    k = pl.program_id(1)
    last_i = pl.num_programs(0) - 1
    last_k = pl.num_programs(1) - 1

    @pl.when(jnp.logical_and(i == 0, k == 0))
    def _():
        pool_ref[...] = jnp.zeros_like(pool_ref)

    @pl.when(k == 0)
    def _():
        acc_ref[...] = jnp.zeros_like(acc_ref)

    acc_ref[...] += jnp.dot(adj_ref[...].astype(jnp.float32), hk_ref[...],
                            preferred_element_type=jnp.float32)

    @pl.when(k == last_k)
    def _():
        h = (jnp.dot(acc_ref[...], wrel_ref[...], preferred_element_type=jnp.float32)
             + jnp.dot(hi_ref[...], wroot_ref[...], preferred_element_type=jnp.float32)
             + b_ref[...])
        h = jnp.maximum(h, 0.0)                            # [TM, H3] >= 0 after ReLU
        # Running per-graph max over this row tile. The multiplicative mask is
        # valid because h >= 0; padded / other-graph nodes contribute 0.
        # (Note: an empty graph pools to 0 here, not the reference's -inf max.)
        m = mask_ref[...]                                  # [G, TM], lane-dense
        tile_max = jnp.max(m[:, :, None] * h[None, :, :], axis=1)   # [G, H3]
        pool_ref[...] = jnp.maximum(pool_ref[...], tile_max)

    @pl.when(jnp.logical_and(i == last_i, k == last_k))
    def _():
        # TODO(synk): for large G, emit a lane-dense [1, G_pad] slab instead of
        # this width-1 column store; negligible at G=2.
        out_ref[...] = (jnp.dot(pool_ref[...], wl_ref[...],
                                preferred_element_type=jnp.float32) + bl_ref[...])


# ------------------------------ pallas_call glue ------------------------------

def _compiler_params(parallel_rows):
    # Row axis "parallel" lets v7x split row tiles across its 2 TensorCores
    # (no-op on v5e/v6e); contraction axis is last and "arbitrary".
    # vmem_limit_bytes is set explicitly so tiling stays valid on v7x (64 MiB).
    return pltpu.CompilerParams(
        dimension_semantics=(("parallel" if parallel_rows else "arbitrary"),
                             "arbitrary"),
        vmem_limit_bytes=32 * 1024 * 1024,
    )


def _graph_conv(adj_bf16, h, w_rel, w_root, b, *, tm, tk):
    n_pad = adj_bf16.shape[0]
    f_in = h.shape[1]
    h_out = w_rel.shape[1]
    grid = (n_pad // tm, n_pad // tk)
    return pl.pallas_call(
        _graphconv_kernel,
        out_shape=jax.ShapeDtypeStruct((n_pad, h_out), jnp.float32),
        grid=grid,
        in_specs=[
            pl.BlockSpec((tm, tk), lambda i, k: (i, k)),        # adj tile (bf16, streamed)
            pl.BlockSpec((tk, f_in), lambda i, k: (k, 0)),      # h rows for aggregation
            pl.BlockSpec((tm, f_in), lambda i, k: (i, 0)),      # h rows for root term
            pl.BlockSpec((f_in, h_out), lambda i, k: (0, 0)),   # W_rel  (resident)
            pl.BlockSpec((f_in, h_out), lambda i, k: (0, 0)),   # W_root (resident)
            pl.BlockSpec((1, h_out), lambda i, k: (0, 0)),      # bias   (resident)
        ],
        out_specs=pl.BlockSpec((tm, h_out), lambda i, k: (i, 0)),
        scratch_shapes=[pltpu.VMEM((tm, f_in), jnp.float32)],
        compiler_params=_compiler_params(parallel_rows=True),
    )(adj_bf16, h, h, w_rel, w_root, b)


def _graph_conv_pool_lin(adj_bf16, h, w_rel, w_root, b, mask, w_lin, b_lin,
                         *, tm, tk):
    n_pad = adj_bf16.shape[0]
    f_in = h.shape[1]
    h_out = w_rel.shape[1]
    g = mask.shape[0]
    grid = (n_pad // tm, n_pad // tk)
    return pl.pallas_call(
        _graphconv_pool_lin_kernel,
        out_shape=jax.ShapeDtypeStruct((g, 1), jnp.float32),
        grid=grid,
        in_specs=[
            pl.BlockSpec((tm, tk), lambda i, k: (i, k)),        # adj tile (bf16)
            pl.BlockSpec((tk, f_in), lambda i, k: (k, 0)),      # h rows for aggregation
            pl.BlockSpec((tm, f_in), lambda i, k: (i, 0)),      # h rows for root term
            pl.BlockSpec((f_in, h_out), lambda i, k: (0, 0)),   # W_rel
            pl.BlockSpec((f_in, h_out), lambda i, k: (0, 0)),   # W_root
            pl.BlockSpec((1, h_out), lambda i, k: (0, 0)),      # bias
            pl.BlockSpec((g, tm), lambda i, k: (0, i)),         # graph mask (lane-dense)
            pl.BlockSpec((h_out, 1), lambda i, k: (0, 0)),      # final Linear weight
            pl.BlockSpec((1, 1), lambda i, k: (0, 0)),          # final Linear bias
        ],
        out_specs=pl.BlockSpec((g, 1), lambda i, k: (0, 0)),
        scratch_shapes=[pltpu.VMEM((tm, f_in), jnp.float32),    # aggregation accumulator
                        pltpu.VMEM((g, h_out), jnp.float32)],   # running pooled max
        # The [G, H3] pooling accumulator must see every row tile on one core,
        # so this (smallest) call keeps the row axis "arbitrary".
        compiler_params=_compiler_params(parallel_rows=False),
    )(adj_bf16, h, h, w_rel, w_root, b, mask, w_lin, b_lin)


# ------------------------------- forward glue ---------------------------------

def convex_hull_forward(x, edge_index, batch, params, num_graphs, *, tm=128, tk=128):
    (w1r, w1s, b1, w2r, w2s, b2, w3r, w3s, b3, wl, bl) = params
    n, f_in = x.shape
    step = tm * tk // math.gcd(tm, tk)
    n_pad = max(step, ((n + step - 1) // step) * step)

    # Dense adjacency, A[dst, src] += 1 (message src -> dst, sum aggregation).
    # Stored bf16: edge counts are small exact integers -> lossless, half HBM traffic.
    adj = jnp.zeros((n_pad, n_pad), jnp.float32)
    adj = adj.at[edge_index[1], edge_index[0]].add(1.0).astype(jnp.bfloat16)

    x_pad = jnp.zeros((n_pad, f_in), jnp.float32).at[:n].set(x)

    # Lane-dense [G, N_pad] one-hot graph-membership mask (padded nodes -> 0).
    batch_pad = jnp.pad(batch, (0, n_pad - n), constant_values=-1)
    mask = (jnp.arange(num_graphs)[:, None] == batch_pad[None, :]).astype(jnp.float32)

    h = _graph_conv(adj, x_pad, w1r, w1s, b1, tm=tm, tk=tk)              # [N_pad, 32]
    h = _graph_conv(adj, h, w2r, w2s, b2, tm=tm, tk=tk)                  # [N_pad, 16]
    out = _graph_conv_pool_lin(adj, h, w3r, w3s, b3, mask, wl, bl,
                               tm=tm, tk=tk)                             # [G, 1]
    return out[:, 0]                                                     # squeeze(1)


# ----------------------------- parameter creation ------------------------------

def xavier_uniform(key, fan_in, fan_out):
    bound = (6.0 / (fan_in + fan_out)) ** 0.5
    # stored as [in, out] so the kernel does h @ W
    return jax.random.uniform(key, (fan_in, fan_out), jnp.float32, -bound, bound)


def make_params(key, point_dim, hidden_dim=32):
    h1, h2, h3 = hidden_dim, hidden_dim // 2, hidden_dim // 4
    ks = jax.random.split(key, 7)
    w1r = xavier_uniform(ks[0], point_dim, h1)
    w1s = xavier_uniform(ks[1], point_dim, h1)
    b1 = jnp.zeros((1, h1), jnp.float32)
    w2r = xavier_uniform(ks[2], h1, h2)
    w2s = xavier_uniform(ks[3], h1, h2)
    b2 = jnp.zeros((1, h2), jnp.float32)
    w3r = xavier_uniform(ks[4], h2, h3)
    w3s = xavier_uniform(ks[5], h2, h3)
    b3 = jnp.zeros((1, h3), jnp.float32)
    wl = xavier_uniform(ks[6], h3, 1)
    bl = jnp.zeros((1, 1), jnp.float32)
    return (w1r, w1s, b1, w2r, w2s, b2, w3r, w3s, b3, wl, bl)


# ------------------------------ pure-JAX reference ------------------------------

def reference_forward(x, edge_index, batch, params, num_graphs):
    (w1r, w1s, b1, w2r, w2s, b2, w3r, w3s, b3, wl, bl) = params
    n = x.shape[0]
    adj = jnp.zeros((n, n), jnp.float32).at[edge_index[1], edge_index[0]].add(1.0)

    def conv(h, wr, ws, b):
        return (adj @ h) @ wr + b + h @ ws

    h = jax.nn.relu(conv(x, w1r, w1s, b1))
    h = jax.nn.relu(conv(h, w2r, w2s, b2))
    h = jax.nn.relu(conv(h, w3r, w3s, b3))
    onehot = (batch[:, None] == jnp.arange(num_graphs)[None, :])
    pooled = jnp.max(jnp.where(onehot.T[:, :, None], h[None, :, :], -1e30), axis=1)
    return (pooled @ wl + bl)[:, 0]


# ------------------------------------ main --------------------------------------

if __name__ == "__main__":
    key = jax.random.PRNGKey(0)
    k_x, k_p = jax.random.split(key)

    point_dim = 4
    num_graphs = 2
    nodes_per_graph = 96           # N = 192 -> pads to 256 -> 2x2 grid per conv
    n = num_graphs * nodes_per_graph

    # Node features: [N, point_dim]
    x = jax.random.normal(k_x, (n, point_dim), jnp.float32)

    # Batch vector: first 96 nodes -> graph 0, next 96 -> graph 1
    batch = jnp.repeat(jnp.arange(num_graphs, dtype=jnp.int32), nodes_per_graph)

    # Edge index: bidirectional ring within each graph -> [2, 2*N] edges
    srcs, dsts = [], []
    for g in range(num_graphs):
        base = g * nodes_per_graph
        for i in range(nodes_per_graph):
            a = base + i
            b = base + (i + 1) % nodes_per_graph
            srcs += [a, b]
            dsts += [b, a]
    edge_index = jnp.array([srcs, dsts], dtype=jnp.int32)

    params = make_params(k_p, point_dim)

    out = convex_hull_forward(x, edge_index, batch, params, num_graphs)
    out = jax.block_until_ready(out)

    ref = reference_forward(x, edge_index, batch, params, num_graphs)
    assert out.shape == (num_graphs,)
    assert jnp.allclose(out, ref, atol=1e-4, rtol=1e-4), (out, ref)

    print("KERNEL_OK")
</pallas_src>

<mosaic_0001>
module attributes {stable_mosaic.version = 11 : i64} {
  func.func @_graphconv_kernel(%arg0: i32, %arg1: i32, %arg2: memref<128x128xbf16, #tpu.memory_space<vmem>>, %arg3: memref<128x4xf32, #tpu.memory_space<vmem>>, %arg4: memref<128x4xf32, #tpu.memory_space<vmem>>, %arg5: memref<4x32xf32, #tpu.memory_space<vmem>>, %arg6: memref<4x32xf32, #tpu.memory_space<vmem>>, %arg7: memref<1x32xf32, #tpu.memory_space<vmem>>, %arg8: memref<128x32xf32, #tpu.memory_space<vmem>>, %arg9: memref<128x4xf32, #tpu.memory_space<vmem>>) attributes {dimension_semantics = [#tpu.dimension_semantics<parallel>, #tpu.dimension_semantics<arbitrary>], iteration_bounds = array<i64: 2, 2>, scalar_prefetch = 0 : i64, scratch_operands = 1 : i64, tpu.core_type = #tpu.core_type<tc>, window_params = [{transform_indices = @transform_0, window_bounds = array<i64: 128, 128>}, {transform_indices = @transform_1, window_bounds = array<i64: 128, 4>}, {transform_indices = @transform_2, window_bounds = array<i64: 128, 4>}, {pipeline_mode = #tpu.pipeline_mode<synchronous>, transform_indices = @transform_3, window_bounds = array<i64: 4, 32>}, {pipeline_mode = #tpu.pipeline_mode<synchronous>, transform_indices = @transform_4, window_bounds = array<i64: 4, 32>}, {pipeline_mode = #tpu.pipeline_mode<synchronous>, transform_indices = @transform_5, window_bounds = array<i64: 1, 32>}, {transform_indices = @transform_6, window_bounds = array<i64: 128, 32>}]} {
    %c0_i32 = arith.constant 0 : i32
    %0 = arith.cmpi eq, %arg1, %c0_i32 : i32
    %1 = arith.extui %0 : i1 to i32
    %c0_i32_0 = arith.constant 0 : i32
    %2 = arith.cmpi ne, %1, %c0_i32_0 : i32
    scf.if %2 {
      %cst_9 = arith.constant 0.000000e+00 : f32
      %13 = vector.broadcast %cst_9 : f32 to vector<128x4xf32>
      %c0_10 = arith.constant 0 : index
      %c0_11 = arith.constant 0 : index
      %14 = vector.load %arg9[%c0_10, %c0_11] : memref<128x4xf32, #tpu.memory_space<vmem>>, vector<128x4xf32>
      tpu.vector_store %arg9[%c0_10, %c0_11], %13 {strides = array<i32>} : memref<128x4xf32, #tpu.memory_space<vmem>>, vector<128x4xf32>,
    } else {
    }
    %c0 = arith.constant 0 : index
    %c0_1 = arith.constant 0 : index
    %3 = vector.load %arg9[%c0, %c0_1] : memref<128x4xf32, #tpu.memory_space<vmem>>, vector<128x4xf32>
    %c0_2 = arith.constant 0 : index
    %c0_3 = arith.constant 0 : index
    %4 = vector.load %arg2[%c0_2, %c0_3] : memref<128x128xbf16, #tpu.memory_space<vmem>>, vector<128x128xbf16>
    %5 = arith.extf %4 : vector<128x128xbf16> to vector<128x128xf32>
    %c0_4 = arith.constant 0 : index
    %c0_5 = arith.constant 0 : index
    %6 = vector.load %arg3[%c0_4, %c0_5] : memref<128x4xf32, #tpu.memory_space<vmem>>, vector<128x4xf32>
    %cst = arith.constant dense<0.000000e+00> : vector<128x4xf32>
    %7 = tpu.matmul %5, %6, %cst {dimension_numbers = #tpu.dot_dimension_numbers<[1], [0], [0], [1], [0, 0, 1, 1], [], []>} : vector<128x128xf32>, vector<128x4xf32>, vector<128x4xf32> -> vector<128x4xf32>
    %8 = arith.addf %3, %7 : vector<128x4xf32>
    %c0_6 = arith.constant 0 : index
    %c0_7 = arith.constant 0 : index
    %9 = vector.load %arg9[%c0_6, %c0_7] : memref<128x4xf32, #tpu.memory_space<vmem>>, vector<128x4xf32>
    tpu.vector_store %arg9[%c0_6, %c0_7], %8 {strides = array<i32>} : memref<128x4xf32, #tpu.memory_space<vmem>>, vector<128x4xf32>,
    %c1_i32 = arith.constant 1 : i32
    %10 = arith.cmpi eq, %arg1, %c1_i32 : i32
    %11 = arith.extui %10 : i1 to i32
    %c0_i32_8 = arith.constant 0 : i32
    %12 = arith.cmpi ne, %11, %c0_i32_8 : i32
    scf.if %12 {
      %c0_9 = arith.constant 0 : index
      %c0_10 = arith.constant 0 : index
      %13 = vector.load %arg9[%c0_9, %c0_10] : memref<128x4xf32, #tpu.memory_space<vmem>>, vector<128x4xf32>
      %c0_11 = arith.constant 0 : index
      %c0_12 = arith.constant 0 : index
      %14 = vector.load %arg5[%c0_11, %c0_12] : memref<4x32xf32, #tpu.memory_space<vmem>>, vector<4x32xf32>
      %cst_13 = arith.constant dense<0.000000e+00> : vector<128x32xf32>
      %15 = tpu.matmul %13, %14, %cst_13 {dimension_numbers = #tpu.dot_dimension_numbers<[1], [0], [0], [1], [0, 0, 1, 1], [], []>} : vector<128x4xf32>, vector<4x32xf32>, vector<128x32xf32> -> vector<128x32xf32>
      %c0_14 = arith.constant 0 : index
      %c0_15 = arith.constant 0 : index
      %16 = vector.load %arg4[%c0_14, %c0_15] : memref<128x4xf32, #tpu.memory_space<vmem>>, vector<128x4xf32>
      %c0_16 = arith.constant 0 : index
      %c0_17 = arith.constant 0 : index
      %17 = vector.load %arg6[%c0_16, %c0_17] : memref<4x32xf32, #tpu.memory_space<vmem>>, vector<4x32xf32>
      %cst_18 = arith.constant dense<0.000000e+00> : vector<128x32xf32>
      %18 = tpu.matmul %16, %17, %cst_18 {dimension_numbers = #tpu.dot_dimension_numbers<[1], [0], [0], [1], [0, 0, 1, 1], [], []>} : vector<128x4xf32>, vector<4x32xf32>, vector<128x32xf32> -> vector<128x32xf32>
      %19 = arith.addf %15, %18 : vector<128x32xf32>
      %c0_19 = arith.constant 0 : index
      %c0_20 = arith.constant 0 : index
      %20 = vector.load %arg7[%c0_19, %c0_20] : memref<1x32xf32, #tpu.memory_space<vmem>>, vector<1x32xf32>
      %21 = vector.broadcast %20 : vector<1x32xf32> to vector<128x32xf32>
      %22 = arith.addf %19, %21 : vector<128x32xf32>
      %cst_21 = arith.constant 0.000000e+00 : f32
      %23 = vector.broadcast %cst_21 : f32 to vector<128x32xf32>
      %24 = arith.maximumf %22, %23 : vector<128x32xf32>
      %c0_22 = arith.constant 0 : index
      %c0_23 = arith.constant 0 : index
      %25 = vector.load %arg8[%c0_22, %c0_23] : memref<128x32xf32, #tpu.memory_space<vmem>>, vector<128x32xf32>
      tpu.vector_store %arg8[%c0_22, %c0_23], %24 {strides = array<i32>} : memref<128x32xf32, #tpu.memory_space<vmem>>, vector<128x32xf32>,
    } else {
    }
    return
  }
  func.func @transform_0(%arg0: i32, %arg1: i32) -> (i32, i32) {
    %c0_i32 = arith.constant 0 : i32
    return %arg0, %arg1 : i32, i32
  }
  func.func @transform_1(%arg0: i32, %arg1: i32) -> (i32, i32) {
    %c0_i32 = arith.constant 0 : i32
    %c0_i32_0 = arith.constant 0 : i32
    return %arg1, %c0_i32 : i32, i32
  }
  func.func @transform_2(%arg0: i32, %arg1: i32) -> (i32, i32) {
    %c0_i32 = arith.constant 0 : i32
    %c0_i32_0 = arith.constant 0 : i32
    return %arg0, %c0_i32 : i32, i32
  }
  func.func @transform_3(%arg0: i32, %arg1: i32) -> (i32, i32) {
    %c0_i32 = arith.constant 0 : i32
    %c0_i32_0 = arith.constant 0 : i32
    %c0_i32_1 = arith.constant 0 : i32
    return %c0_i32, %c0_i32_0 : i32, i32
  }
  func.func @transform_4(%arg0: i32, %arg1: i32) -> (i32, i32) {
    %c0_i32 = arith.constant 0 : i32
    %c0_i32_0 = arith.constant 0 : i32
    %c0_i32_1 = arith.constant 0 : i32
    return %c0_i32, %c0_i32_0 : i32, i32
  }
  func.func @transform_5(%arg0: i32, %arg1: i32) -> (i32, i32) {
    %c0_i32 = arith.constant 0 : i32
    %c0_i32_0 = arith.constant 0 : i32
    %c0_i32_1 = arith.constant 0 : i32
    return %c0_i32, %c0_i32_0 : i32, i32
  }
  func.func @transform_6(%arg0: i32, %arg1: i32) -> (i32, i32) {
    %c0_i32 = arith.constant 0 : i32
    %c0_i32_0 = arith.constant 0 : i32
    return %arg0, %c0_i32 : i32, i32
  }
}

</mosaic_0001>

<llo_original>
// kernel: tpu_custom_call.1
$region0: #{tpu_custom_call.1}
  #allocation0 [shape = 'u32[]', space=smem, size = 0x4, offset = 0x4, fixed_abs, tag = 'smem constant byte address 0x4 - core index']
  #allocation1 [shape = 'u32[144,128]{1,0:T(1,128)}', space=vmem, size = 0x12000, scoped, tag = 'internal scratch']
  #allocation2 [shape = 'f32[128,4]{1,0:T(8,128)}', space=vmem, size = 0x10000, scoped, tag = 'scratch operand']
  %s0 = inlined_call_operand.vmem [shape: bf16[256,256], index: 0, kind: input, shape index: {}]
  %s1 = inlined_call_operand.vmem [shape: f32[256,4], index: 1, kind: input, shape index: {}]
  %s2 = inlined_call_operand.vmem [shape: f32[256,4], index: 2, kind: input, shape index: {}]
  %s3 = inlined_call_operand.vmem [shape: f32[4,32], index: 3, kind: input, shape index: {}]
  %s4 = inlined_call_operand.vmem [shape: f32[4,32], index: 4, kind: input, shape index: {}]
  %s5 = inlined_call_operand.vmem [shape: f32[1,32], index: 5, kind: input, shape index: {}]
  %s6 = inlined_call_operand.vmem [shape: f32[256,32], index: 6, kind: output, shape index: {}]
  %s7 = sld [smem:[#allocation0]]
  $region106: #{tpu_custom_call.1} parent=0
    _
  %s9 = ssub.s32 1, %s7
  %s10 = scalar_select 0, %s9, %s7
  $region1: #{tpu_custom_call.1} parent=0
    #allocation3 [shape = 'u8[65536]{0}', space=vmem, size = 0x10000, scoped, tag = 'input window, operand 0']
    loop: start=0, step=1, limit=6
    $region2: #{tpu_custom_call.1} parent=1 // loop_pre_header
      _
    $region3: #{tpu_custom_call.1} parent=1 // loop_header
      %s12 = sphi 0, %s16
      %p13 = scmp.ge.s32.totalorder %s12, 6
      %s19 = sphi 0, %s31
      %s20 = sphi 0, %s27
      %s21 = sphi 0, %s19
      %s22 = sphi 0, %s20
      %s23 = sphi 0, %s21
      %s24 = sphi 0, %s22
      %s36 = sphi 0, %s38
      %s39 = sphi 0, %s36
      %s40 = sphi 0, %s39
      %s56 = sphi 0, %s40
      %s62 = sphi 0, %s64
      %s65 = sphi 0, %s62
      %s66 = sphi 0, %s65
      %s82 = sphi 0, %s66
      %s88 = sphi 0, %s90
      %s91 = sphi 0, %s88
      %s92 = sphi 0, %s91
      %s108 = sphi 0, %s92
      %s112 = sphi 0, %s112
      %s114 = sphi 0, %s112
      %s115 = sphi 0, %s114
      %s129 = sphi 0, %s115
      %s133 = sphi 0, %s133
      %s135 = sphi 0, %s133
      %s136 = sphi 0, %s135
      %s150 = sphi 0, %s136
      %s154 = sphi 0, %s154
      %s156 = sphi 0, %s154
      %s157 = sphi 0, %s156
      %s171 = sphi 0, %s157
      %s177 = sphi 0, %s179
      %s180 = sphi 0, %s177
      %s181 = sphi 0, %s180
      %s197 = sphi 0, %s181
    $region4: #{tpu_custom_call.1} parent=1 // loop_header_branch
      %15 = sbr.rel (%p13) target = $region8
    $region5: #{tpu_custom_call.1} parent=1 // loop_body
      %s17 = ssub.s32 %s12, 1
      %s18 = ssub.s32 %s12, 2
      %s25 = sadd.s32 1, %s20
      %p26 = scmp.ge.s32.totalorder %s25, 2
      %s27 = scalar_select %p26, 0, %s25
      %s28 = sadd.s32 1, %s19
      %s29 = scalar_select %p26, %s28, %s19
      %p30 = scmp.ge.s32.totalorder %s29, 2
      %s31 = scalar_select %p30, 0, %s29
      %s32 = ssub.s32 %s19, %s31
      %s33 = ssub.s32 %s20, %s27
      %s34 = sor.u32 %s32, %s33
      %p35 = scmp.eq.s32.totalorder %s34, 0
      %s37 = sadd.s32 %s36, 1
      %s38 = scalar_select %p35, %s36, %s37
      %p41 = pneg %p35
      %p42 = scmp.eq.s32.totalorder %s12, 3
      %p43 = por %p41, %p42
      %p44 = scmp.ne.s32.totalorder %s36, %s39
      %p45 = scmp.eq.s32.totalorder %s12, 0
      %p46 = por %p44, %p45
      %p47 = scmp.ne.s32.totalorder %s36, %s39
      %p48 = scmp.eq.s32.totalorder %s17, 3
      %p49 = por %p47, %p48
      %p50 = scmp.ne.s32.totalorder %s39, %s40
      %p51 = scmp.eq.s32.totalorder %s17, 0
      %p52 = por %p50, %p51
      %p53 = scmp.ne.s32.totalorder %s39, %s40
      %p54 = scmp.eq.s32.totalorder %s18, 3
      %p55 = por %p53, %p54
      %p57 = scmp.ne.s32.totalorder %s40, %s56
      %p58 = scmp.eq.s32.totalorder %s18, 0
      %p59 = por %p57, %p58
      %s60 = ssub.s32 %s20, %s27
      %p61 = scmp.eq.s32.totalorder %s60, 0
      %s63 = sadd.s32 %s62, 1
      %s64 = scalar_select %p61, %s62, %s63
      %p67 = pneg %p61
      %p68 = scmp.eq.s32.totalorder %s12, 3
      %p69 = por %p67, %p68
      %p70 = scmp.ne.s32.totalorder %s62, %s65
      %p71 = scmp.eq.s32.totalorder %s12, 0
      %p72 = por %p70, %p71
      %p73 = scmp.ne.s32.totalorder %s62, %s65
      %p74 = scmp.eq.s32.totalorder %s17, 3
      %p75 = por %p73, %p74
      %p76 = scmp.ne.s32.totalorder %s65, %s66
      %p77 = scmp.eq.s32.totalorder %s17, 0
      %p78 = por %p76, %p77
      %p79 = scmp.ne.s32.totalorder %s65, %s66
      %p80 = scmp.eq.s32.totalorder %s18, 3
      %p81 = por %p79, %p80
      %p83 = scmp.ne.s32.totalorder %s66, %s82
      %p84 = scmp.eq.s32.totalorder %s18, 0
      %p85 = por %p83, %p84
      %s86 = ssub.s32 %s19, %s31
      %p87 = scmp.eq.s32.totalorder %s86, 0
      %s89 = sadd.s32 %s88, 1
      %s90 = scalar_select %p87, %s88, %s89
      %p93 = pneg %p87
      %p94 = scmp.eq.s32.totalorder %s12, 3
      %p95 = por %p93, %p94
      %p96 = scmp.ne.s32.totalorder %s88, %s91
      %p97 = scmp.eq.s32.totalorder %s12, 0
      %p98 = por %p96, %p97
      %p99 = scmp.ne.s32.totalorder %s88, %s91
      %p100 = scmp.eq.s32.totalorder %s17, 3
      %p101 = por %p99, %p100
      %p102 = scmp.ne.s32.totalorder %s91, %s92
      %p103 = scmp.eq.s32.totalorder %s17, 0
      %p104 = por %p102, %p103
      %p105 = scmp.ne.s32.totalorder %s91, %s92
      %p106 = scmp.eq.s32.totalorder %s18, 3
      %p107 = por %p105, %p106
      %p109 = scmp.ne.s32.totalorder %s92, %s108
      %p110 = scmp.eq.s32.totalorder %s18, 0
      %p111 = por %p109, %p110
      %s113 = sadd.s32 %s112, 1
      %p116 = scmp.eq.s32.totalorder %s12, 3
      %p117 = scmp.ne.s32.totalorder %s112, %s114
      %p118 = scmp.eq.s32.totalorder %s12, 0
      %p119 = por %p117, %p118
      %p120 = scmp.ne.s32.totalorder %s112, %s114
      %p121 = scmp.eq.s32.totalorder %s17, 3
      %p122 = por %p120, %p121
      %p123 = scmp.ne.s32.totalorder %s114, %s115
      %p124 = scmp.eq.s32.totalorder %s17, 0
      %p125 = por %p123, %p124
      %p126 = scmp.ne.s32.totalorder %s114, %s115
      %p127 = scmp.eq.s32.totalorder %s18, 3
      %p128 = por %p126, %p127
      %p130 = scmp.ne.s32.totalorder %s115, %s129
      %p131 = scmp.eq.s32.totalorder %s18, 0
      %p132 = por %p130, %p131
      %s134 = sadd.s32 %s133, 1
      %p137 = scmp.eq.s32.totalorder %s12, 3
      %p138 = scmp.ne.s32.totalorder %s133, %s135
      %p139 = scmp.eq.s32.totalorder %s12, 0
      %p140 = por %p138, %p139
      %p141 = scmp.ne.s32.totalorder %s133, %s135
      %p142 = scmp.eq.s32.totalorder %s17, 3
      %p143 = por %p141, %p142
      %p144 = scmp.ne.s32.totalorder %s135, %s136
      %p145 = scmp.eq.s32.totalorder %s17, 0
      %p146 = por %p144, %p145
      %p147 = scmp.ne.s32.totalorder %s135, %s136
      %p148 = scmp.eq.s32.totalorder %s18, 3
      %p149 = por %p147, %p148
      %p151 = scmp.ne.s32.totalorder %s136, %s150
      %p152 = scmp.eq.s32.totalorder %s18, 0
      %p153 = por %p151, %p152
      %s155 = sadd.s32 %s154, 1
      %p158 = scmp.eq.s32.totalorder %s12, 3
      %p159 = scmp.ne.s32.totalorder %s154, %s156
      %p160 = scmp.eq.s32.totalorder %s12, 0
      %p161 = por %p159, %p160
      %p162 = scmp.ne.s32.totalorder %s154, %s156
      %p163 = scmp.eq.s32.totalorder %s17, 3
      %p164 = por %p162, %p163
      %p165 = scmp.ne.s32.totalorder %s156, %s157
      %p166 = scmp.eq.s32.totalorder %s17, 0
      %p167 = por %p165, %p166
      %p168 = scmp.ne.s32.totalorder %s156, %s157
      %p169 = scmp.eq.s32.totalorder %s18, 3
      %p170 = por %p168, %p169
      %p172 = scmp.ne.s32.totalorder %s157, %s171
      %p173 = scmp.eq.s32.totalorder %s18, 0
      %p174 = por %p172, %p173
      %s175 = ssub.s32 %s19, %s31
      %p176 = scmp.eq.s32.totalorder %s175, 0
      %s178 = sadd.s32 %s177, 1
      %s179 = scalar_select %p176, %s177, %s178
      %p182 = pneg %p176
      %p183 = scmp.eq.s32.totalorder %s12, 3
      %p184 = por %p182, %p183
      %p185 = scmp.ne.s32.totalorder %s177, %s180
      %p186 = scmp.eq.s32.totalorder %s12, 0
      %p187 = por %p185, %p186
      %p188 = scmp.ne.s32.totalorder %s177, %s180
      %p189 = scmp.eq.s32.totalorder %s17, 3
      %p190 = por %p188, %p189
      %p191 = scmp.ne.s32.totalorder %s180, %s181
      %p192 = scmp.eq.s32.totalorder %s17, 0
      %p193 = por %p191, %p192
      %p194 = scmp.ne.s32.totalorder %s180, %s181
      %p195 = scmp.eq.s32.totalorder %s18, 3
      %p196 = por %p194, %p195
      %p198 = scmp.ne.s32.totalorder %s181, %s197
      %p199 = scmp.eq.s32.totalorder %s18, 0
      %p200 = por %p198, %p199
      %p201 = scmp.le.s32.totalorder 1, %s12
      %p202 = scmp.lt.s32.totalorder %s12, 5
      %p203 = pnand %p201, %p202
      %p204 = pneg %p203
      // Predicated region
      $region9: #{tpu_custom_call.1} parent=5 // pred_check
        _
      $region10: #{tpu_custom_call.1} parent=5 // pred_check_branch
        %206 = sbr.rel (%p203) target = $region12
      $region11: #{tpu_custom_call.1} parent=5 // pred_region
        %s207 = ssub.s32 %s12, 1
        // Predicated region
        $region13: #{tpu_custom_call.1} parent=11 // pred_check
          %p208 = pneg %p125
        $region14: #{tpu_custom_call.1} parent=11 // pred_check_branch
          %210 = sbr.rel (%p208) target = $region16
        $region15: #{tpu_custom_call.1} parent=11 // pred_region
          _
        $region16: #{tpu_custom_call.1} parent=11 // pred_fallthru
          _
        // Predicated region
        $region17: #{tpu_custom_call.1} parent=11 // pred_check
          %p211 = pneg %p146
        $region18: #{tpu_custom_call.1} parent=11 // pred_check_branch
          %213 = sbr.rel (%p211) target = $region20
        $region19: #{tpu_custom_call.1} parent=11 // pred_region
          _
        $region20: #{tpu_custom_call.1} parent=11 // pred_fallthru
          _
        // Predicated region
        $region21: #{tpu_custom_call.1} parent=11 // pred_check
          %p214 = pneg %p167
        $region22: #{tpu_custom_call.1} parent=11 // pred_check_branch
          %216 = sbr.rel (%p214) target = $region24
        $region23: #{tpu_custom_call.1} parent=11 // pred_region
          _
        $region24: #{tpu_custom_call.1} parent=11 // pred_fallthru
          _
      $region12: #{tpu_custom_call.1} parent=5 // pred_fallthru
        _
      %p217 = scmp.lt.s32.totalorder %s12, 4
      // Predicated region
      $region25: #{tpu_custom_call.1} parent=5 // pred_check
        %p218 = pneg %p217
      $region26: #{tpu_custom_call.1} parent=5 // pred_check_branch
        %220 = sbr.rel (%p218) target = $region28
      $region27: #{tpu_custom_call.1} parent=5 // pred_region
        // Predicated region
        $region29: #{tpu_custom_call.1} parent=27 // pred_check
          %p221 = pneg %p46
        $region30: #{tpu_custom_call.1} parent=27 // pred_check_branch
          %223 = sbr.rel (%p221) target = $region32
        $region31: #{tpu_custom_call.1} parent=27 // pred_region
          %s224 = sand.u32 %s36, 1
          %s225 = sand.u32 %s36, 1
          %s226 = smul.addr %s225, 64
          %s227 = scalar_lea.vmem [#allocation3], %s226
          %s228 = smul.u32 16, %s19
          %s229 = smul.addr %s228, 2
          %s230 = sadd.s32 %s20, %s229
          %s231 = smul.addr %s230, 4
          %s232 = scalar_lea.vmem %s0, %s231
          // Predicated region
          $region33: #{tpu_custom_call.1} parent=31 // pred_check
            _
          $region34: #{tpu_custom_call.1} parent=31 // pred_check_branch
            %234 = sbr.rel (0) target = $region36
          $region35: #{tpu_custom_call.1} parent=31 // pred_region
            // Predicated region
            $region37: #{tpu_custom_call.1} parent=35 // pred_check
              _
            $region38: #{tpu_custom_call.1} parent=35 // pred_check_branch
              %236 = sbr.rel target = $region40
            $region39: #{tpu_custom_call.1} parent=35 // pred_region
              // Predicated region
              $region52: #{tpu_custom_call.1} parent=39 // pred_check
                _
              $region53: #{tpu_custom_call.1} parent=39 // pred_check_branch
                %281 = sbr.rel (0) target = $region55
              $region54: #{tpu_custom_call.1} parent=39 // pred_region
                loop: start=0, step=1, limit=1
                $region56: #{tpu_custom_call.1} parent=54 // loop_pre_header
                  _
                $region57: #{tpu_custom_call.1} parent=54 // loop_header
                  %s283 = sphi 0, %s287
                  %p284 = scmp.ge.s32.totalorder %s283, 1
                  %s288 = sphi %s232, %s232
                  %s289 = sphi %s227, %s227
                $region58: #{tpu_custom_call.1} parent=54 // loop_header_branch
                  %286 = sbr.rel (%p284) target = $region62
                $region59: #{tpu_custom_call.1} parent=54 // loop_body
                  _
                $region60: #{tpu_custom_call.1} parent=54 // loop_footer
                  %s287 = sadd.s32 1, %s283
                $region61: #{tpu_custom_call.1} parent=54 // loop_footer_branch
                  %282 = sbr.rel target = $region57
                $region62: #{tpu_custom_call.1} parent=54 // loop_exit
                  _
                loop: start=0, step=1, limit=1
                $region63: #{tpu_custom_call.1} parent=54 // loop_pre_header
                  _
                $region64: #{tpu_custom_call.1} parent=54 // loop_header
                  %s292 = sphi 0, %s296
                  %p293 = scmp.ge.s32.totalorder %s292, 1
                  %s297 = sphi %s232, %s232
                  %s298 = sphi %s227, %s227
                $region65: #{tpu_custom_call.1} parent=54 // loop_header_branch
                  %295 = sbr.rel (%p293) target = $region69
                $region66: #{tpu_custom_call.1} parent=54 // loop_body
                  %v299 = vld [vmem:[%s297] sm:$0xf]
                  %300 = vst [vmem:[%s298] sm:$0xf] %v299
                  %v301 = vld [vmem:[%s297 + $0x8] sm:$0xf]
                  %302 = vst [vmem:[%s298 + $0x4] sm:$0xf] %v301
                  %v303 = vld [vmem:[%s297 + $0x10] sm:$0xf]
                  %304 = vst [vmem:[%s298 + $0x8] sm:$0xf] %v303
                  %v305 = vld [vmem:[%s297 + $0x18] sm:$0xf]
                  %306 = vst [vmem:[%s298 + $0xc] sm:$0xf] %v305
                  %v307 = vld [vmem:[%s297 + $0x20] sm:$0xf]
                  %308 = vst [vmem:[%s298 + $0x10] sm:$0xf] %v307
                  %v309 = vld [vmem:[%s297 + $0x28] sm:$0xf]
                  %310 = vst [vmem:[%s298 + $0x14] sm:$0xf] %v309
                  %v311 = vld [vmem:[%s297 + $0x30] sm:$0xf]
                  %312 = vst [vmem:[%s298 + $0x18] sm:$0xf] %v311
                  %v313 = vld [vmem:[%s297 + $0x38] sm:$0xf]
                  %314 = vst [vmem:[%s298 + $0x1c] sm:$0xf] %v313
                  %v315 = vld [vmem:[%s297 + $0x40] sm:$0xf]
                  %316 = vst [vmem:[%s298 + $0x20] sm:$0xf] %v315
                  %v317 = vld [vmem:[%s297 + $0x48] sm:$0xf]
                  %318 = vst [vmem:[%s298 + $0x24] sm:$0xf] %v317
                  %v319 = vld [vmem:[%s297 + $0x50] sm:$0xf]
                  %320 = vst [vmem:[%s298 + $0x28] sm:$0xf] %v319
                  %v321 = vld [vmem:[%s297 + $0x58] sm:$0xf]
                  %322 = vst [vmem:[%s298 + $0x2c] sm:$0xf] %v321
                  %v323 = vld [vmem:[%s297 + $0x60] sm:$0xf]
                  %324 = vst [vmem:[%s298 + $0x30] sm:$0xf] %v323
                  %v325 = vld [vmem:[%s297 + $0x68] sm:$0xf]
                  %326 = vst [vmem:[%s298 + $0x34] sm:$0xf] %v325
                  %v327 = vld [vmem:[%s297 + $0x70] sm:$0xf]
                  %328 = vst [vmem:[%s298 + $0x38] sm:$0xf] %v327
                  %v329 = vld [vmem:[%s297 + $0x78] sm:$0xf]
                  %330 = vst [vmem:[%s298 + $0x3c] sm:$0xf] %v329
                $region67: #{tpu_custom_call.1} parent=54 // loop_footer
                  %s296 = sadd.s32 1, %s292
                $region68: #{tpu_custom_call.1} parent=54 // loop_footer_branch
                  %291 = sbr.rel target = $region64
                $region69: #{tpu_custom_call.1} parent=54 // loop_exit
                  _
              $region55: #{tpu_custom_call.1} parent=39 // pred_fallthru
                _
            $region40: #{tpu_custom_call.1} parent=35 // pred_fallthru
              _
            // Predicated region
            $region41: #{tpu_custom_call.1} parent=35 // pred_check
              _
            $region42: #{tpu_custom_call.1} parent=35 // pred_check_branch
              %238 = sbr.rel (0) target = $region44
            $region43: #{tpu_custom_call.1} parent=35 // pred_region
              loop: start=0, step=1, limit=1
              $region45: #{tpu_custom_call.1} parent=43 // loop_pre_header
                _
              $region46: #{tpu_custom_call.1} parent=43 // loop_header
                %s241 = sphi 0, %s245
                %p242 = scmp.ge.s32.totalorder %s241, 1
                %s246 = sphi %s232, %s232
                %s247 = sphi %s227, %s227
              $region47: #{tpu_custom_call.1} parent=43 // loop_header_branch
                %244 = sbr.rel (%p242) target = $region51
              $region48: #{tpu_custom_call.1} parent=43 // loop_body
                %v248 = vld [vmem:[%s246] sm:$0xf]
                %249 = vst [vmem:[%s247] sm:$0xf] %v248
                %v250 = vld [vmem:[%s246 + $0x8] sm:$0xf]
                %251 = vst [vmem:[%s247 + $0x4] sm:$0xf] %v250
                %v252 = vld [vmem:[%s246 + $0x10] sm:$0xf]
                %253 = vst [vmem:[%s247 + $0x8] sm:$0xf] %v252
                %v254 = vld [vmem:[%s246 + $0x18] sm:$0xf]
                %255 = vst [vmem:[%s247 + $0xc] sm:$0xf] %v254
                %v256 = vld [vmem:[%s246 + $0x20] sm:$0xf]
                %257 = vst [vmem:[%s247 + $0x10] sm:$0xf] %v256
                %v258 = vld [vmem:[%s246 + $0x28] sm:$0xf]
                %259 = vst [vmem:[%s247 + $0x14] sm:$0xf] %v258
                %v260 = vld [vmem:[%s246 + $0x30] sm:$0xf]
                %261 = vst [vmem:[%s247 + $0x18] sm:$0xf] %v260
                %v262 = vld [vmem:[%s246 + $0x38] sm:$0xf]
                %263 = vst [vmem:[%s247 + $0x1c] sm:$0xf] %v262
                %v264 = vld [vmem:[%s246 + $0x40] sm:$0xf]
                %265 = vst [vmem:[%s247 + $0x20] sm:$0xf] %v264
                %v266 = vld [vmem:[%s246 + $0x48] sm:$0xf]
                %267 = vst [vmem:[%s247 + $0x24] sm:$0xf] %v266
                %v268 = vld [vmem:[%s246 + $0x50] sm:$0xf]
                %269 = vst [vmem:[%s247 + $0x28] sm:$0xf] %v268
                %v270 = vld [vmem:[%s246 + $0x58] sm:$0xf]
                %271 = vst [vmem:[%s247 + $0x2c] sm:$0xf] %v270
                %v272 = vld [vmem:[%s246 + $0x60] sm:$0xf]
                %273 = vst [vmem:[%s247 + $0x30] sm:$0xf] %v272
                %v274 = vld [vmem:[%s246 + $0x68] sm:$0xf]
                %275 = vst [vmem:[%s247 + $0x34] sm:$0xf] %v274
                %v276 = vld [vmem:[%s246 + $0x70] sm:$0xf]
                %277 = vst [vmem:[%s247 + $0x38] sm:$0xf] %v276
                %v278 = vld [vmem:[%s246 + $0x78] sm:$0xf]
                %279 = vst [vmem:[%s247 + $0x3c] sm:$0xf] %v278
              $region49: #{tpu_custom_call.1} parent=43 // loop_footer
                %s245 = sadd.s32 1, %s241
              $region50: #{tpu_custom_call.1} parent=43 // loop_footer_branch
                %240 = sbr.rel target = $region46
              $region51: #{tpu_custom_call.1} parent=43 // loop_exit
                _
            $region44: #{tpu_custom_call.1} parent=35 // pred_fallthru
              _
          $region36: #{tpu_custom_call.1} parent=31 // pred_fallthru
            _
          %331 = vnop
        $region32: #{tpu_custom_call.1} parent=27 // pred_fallthru
          _
        // Predicated region
        $region70: #{tpu_custom_call.1} parent=27 // pred_check
          %p332 = pneg %p72
        $region71: #{tpu_custom_call.1} parent=27 // pred_check_branch
          %334 = sbr.rel (%p332) target = $region73
        $region72: #{tpu_custom_call.1} parent=27 // pred_region
          %s335 = smul.u32 16, %s20
          %p336 = scmp.lt.s32.totalorder %s335, 31
          %s337 = scalar_select %p336, %s335, 31
          %s338 = smul.addr %s337, 8
          %s339 = scalar_lea.vmem %s1, %s338
          %s340 = smul.u32 16, %s20
        $region73: #{tpu_custom_call.1} parent=27 // pred_fallthru
          _
        // Predicated region
        $region74: #{tpu_custom_call.1} parent=27 // pred_check
          %p341 = pneg %p98
        $region75: #{tpu_custom_call.1} parent=27 // pred_check_branch
          %343 = sbr.rel (%p341) target = $region77
        $region76: #{tpu_custom_call.1} parent=27 // pred_region
          %s344 = smul.u32 16, %s19
          %p345 = scmp.lt.s32.totalorder %s344, 31
          %s346 = scalar_select %p345, %s344, 31
          %s347 = smul.addr %s346, 8
          %s348 = scalar_lea.vmem %s2, %s347
          %s349 = smul.u32 16, %s19
        $region77: #{tpu_custom_call.1} parent=27 // pred_fallthru
          _
      $region28: #{tpu_custom_call.1} parent=5 // pred_fallthru
        _
      %p350 = scmp.le.s32.totalorder 1, %s12
      %p351 = scmp.lt.s32.totalorder %s12, 5
      %p352 = pnand %p350, %p351
      %p353 = pneg %p352
      // Predicated region
      $region78: #{tpu_custom_call.1} parent=5 // pred_check
        _
      $region79: #{tpu_custom_call.1} parent=5 // pred_check_branch
        %355 = sbr.rel (%p352) target = $region81
      $region80: #{tpu_custom_call.1} parent=5 // pred_region
        %s356 = ssub.s32 %s12, 1
        %s357 = sand.u32 %s39, 1
        %s358 = sand.u32 %s39, 1
        %s359 = smul.addr %s358, 64
        %s360 = scalar_lea.vmem [#allocation3], %s359
        // Predicated region
        $region82: #{tpu_custom_call.1} parent=80 // pred_check
          %p361 = pneg %p52
        $region83: #{tpu_custom_call.1} parent=80 // pred_check_branch
          %363 = sbr.rel (%p361) target = $region85
        $region84: #{tpu_custom_call.1} parent=80 // pred_region
          _
        $region85: #{tpu_custom_call.1} parent=80 // pred_fallthru
          _
        %s364 = sand.u32 %s39, 1
        %s365 = sand.u32 %s39, 1
        %s366 = smul.addr %s365, 64
        %s367 = scalar_lea.vmem [#allocation3], %s366
        %p368 = pneg %p52
        %p369 = pneg %p49
        %s370 = smul.u32 16, %s22
        %p371 = scmp.lt.s32.totalorder %s370, 31
        %s372 = scalar_select %p371, %s370, 31
        %s373 = smul.addr %s372, 8
        %s374 = scalar_lea.vmem %s1, %s373
        %p375 = pneg %p78
        %p376 = pneg %p75
        %s377 = smul.u32 16, %s21
        %p378 = scmp.lt.s32.totalorder %s377, 31
        %s379 = scalar_select %p378, %s377, 31
        %s380 = smul.addr %s379, 8
        %s381 = scalar_lea.vmem %s2, %s380
        %p382 = pneg %p104
        %p383 = pneg %p101
        %p384 = pneg %p125
        %p385 = pneg %p122
        %p386 = pneg %p146
        %p387 = pneg %p143
        %p388 = pneg %p167
        %p389 = pneg %p164
        %p390 = pneg %p193
        %p391 = pneg %p190
        %s392 = smul.u32 16, %s21
        %p393 = scmp.lt.s32.totalorder %s392, 31
        %s394 = scalar_select %p393, %s392, 31
        %s395 = smul.addr %s394, 8
        %s396 = scalar_lea.vmem %s6, %s395
        %s397 = smul.u32 16, %s21
        %s398 = smul.u32 16, %s22
        %p399 = scmp.lt.s32.totalorder %s398, 31
        %s400 = scalar_select %p399, %s398, 31
        %s401 = smul.addr %s400, 8
        %s402 = scalar_lea.vmem %s1, %s401
        %s403 = smul.u32 16, %s22
        %s404 = smul.u32 16, %s21
        %p405 = scmp.lt.s32.totalorder %s404, 31
        %s406 = scalar_select %p405, %s404, 31
        %s407 = smul.addr %s406, 8
        %s408 = scalar_lea.vmem %s2, %s407
        %s409 = smul.u32 16, %s21
        %s410 = smul.u32 16, %s21
        %p411 = scmp.lt.s32.totalorder %s410, 31
        %s412 = scalar_select %p411, %s410, 31
        %s413 = smul.addr %s412, 8
        %s414 = scalar_lea.vmem %s6, %s413
        %s415 = smul.u32 16, %s21
        %p416 = scmp.eq.s32.totalorder %s22, 0
        // Predicated region
        $region86: #{tpu_custom_call.1} parent=80 // pred_check
          %p417 = pneg %p416
        $region87: #{tpu_custom_call.1} parent=80 // pred_check_branch
          %419 = sbr.rel (%p417) target = $region89
        $region88: #{tpu_custom_call.1} parent=80 // pred_region
          %vm420 = vcmask 31744
          %421 = vst.msk [vmem:[#allocation2] sm:$0xff] %vm420, 0.0
          %422 = vst.msk [vmem:[#allocation2 + $0x8] sm:$0xff] %vm420, 0.0
          %423 = vst.msk [vmem:[#allocation2 + $0x10] sm:$0xff] %vm420, 0.0
          %424 = vst.msk [vmem:[#allocation2 + $0x18] sm:$0xff] %vm420, 0.0
          %425 = vst.msk [vmem:[#allocation2 + $0x20] sm:$0xff] %vm420, 0.0
          %426 = vst.msk [vmem:[#allocation2 + $0x28] sm:$0xff] %vm420, 0.0
          %427 = vst.msk [vmem:[#allocation2 + $0x30] sm:$0xff] %vm420, 0.0
          %428 = vst.msk [vmem:[#allocation2 + $0x38] sm:$0xff] %vm420, 0.0
          %429 = vst.msk [vmem:[#allocation2 + $0x40] sm:$0xff] %vm420, 0.0
          %430 = vst.msk [vmem:[#allocation2 + $0x48] sm:$0xff] %vm420, 0.0
          %431 = vst.msk [vmem:[#allocation2 + $0x50] sm:$0xff] %vm420, 0.0
          %432 = vst.msk [vmem:[#allocation2 + $0x58] sm:$0xff] %vm420, 0.0
          %433 = vst.msk [vmem:[#allocation2 + $0x60] sm:$0xff] %vm420, 0.0
          %434 = vst.msk [vmem:[#allocation2 + $0x68] sm:$0xff] %vm420, 0.0
          %435 = vst.msk [vmem:[#allocation2 + $0x70] sm:$0xff] %vm420, 0.0
          %436 = vst.msk [vmem:[#allocation2 + $0x78] sm:$0xff] %vm420, 0.0
        $region89: #{tpu_custom_call.1} parent=80 // pred_fallthru
          _
        %v437 = vld [vmem:[#allocation2] sm:$0xff]
        %v438 = vld [vmem:[#allocation2 + $0x8] sm:$0xff]
        %v439 = vld [vmem:[#allocation2 + $0x10] sm:$0xff]
        %v440 = vld [vmem:[#allocation2 + $0x18] sm:$0xff]
        %v441 = vld [vmem:[#allocation2 + $0x20] sm:$0xff]
        %v442 = vld [vmem:[#allocation2 + $0x28] sm:$0xff]
        %v443 = vld [vmem:[#allocation2 + $0x30] sm:$0xff]
        %v444 = vld [vmem:[#allocation2 + $0x38] sm:$0xff]
        %v445 = vld [vmem:[#allocation2 + $0x40] sm:$0xff]
        %v446 = vld [vmem:[#allocation2 + $0x48] sm:$0xff]
        %v447 = vld [vmem:[#allocation2 + $0x50] sm:$0xff]
        %v448 = vld [vmem:[#allocation2 + $0x58] sm:$0xff]
        %v449 = vld [vmem:[#allocation2 + $0x60] sm:$0xff]
        %v450 = vld [vmem:[#allocation2 + $0x68] sm:$0xff]
        %v451 = vld [vmem:[#allocation2 + $0x70] sm:$0xff]
        %v452 = vld [vmem:[#allocation2 + $0x78] sm:$0xff]
        %v453 = vld [vmem:[%s360] sm:$0xf]
        %v454 = vld [vmem:[%s360 + $0x4] sm:$0xf]
        %v455 = vld [vmem:[%s360 + $0x8] sm:$0xf]
        %v456 = vld [vmem:[%s360 + $0xc] sm:$0xf]
        %v457 = vld [vmem:[%s360 + $0x10] sm:$0xf]
        %v458 = vld [vmem:[%s360 + $0x14] sm:$0xf]
        %v459 = vld [vmem:[%s360 + $0x18] sm:$0xf]
        %v460 = vld [vmem:[%s360 + $0x1c] sm:$0xf]
        %v461 = vld [vmem:[%s360 + $0x20] sm:$0xf]
        %v462 = vld [vmem:[%s360 + $0x24] sm:$0xf]
        %v463 = vld [vmem:[%s360 + $0x28] sm:$0xf]
        %v464 = vld [vmem:[%s360 + $0x2c] sm:$0xf]
        %v465 = vld [vmem:[%s360 + $0x30] sm:$0xf]
        %v466 = vld [vmem:[%s360 + $0x34] sm:$0xf]
        %v467 = vld [vmem:[%s360 + $0x38] sm:$0xf]
        %v468 = vld [vmem:[%s360 + $0x3c] sm:$0xf]
        %v469 = vunpack.c.l.bf16 %v453
        %v470 = vunpack.c.l.bf16 %v454
        %v471 = vunpack.c.l.bf16 %v455
        %v472 = vunpack.c.l.bf16 %v456
        %v473 = vunpack.c.l.bf16 %v457
        %v474 = vunpack.c.l.bf16 %v458
        %v475 = vunpack.c.l.bf16 %v459
        %v476 = vunpack.c.l.bf16 %v460
        %v477 = vunpack.c.l.bf16 %v461
        %v478 = vunpack.c.l.bf16 %v462
        %v479 = vunpack.c.l.bf16 %v463
        %v480 = vunpack.c.l.bf16 %v464
        %v481 = vunpack.c.l.bf16 %v465
        %v482 = vunpack.c.l.bf16 %v466
        %v483 = vunpack.c.l.bf16 %v467
        %v484 = vunpack.c.l.bf16 %v468
        %v485 = vld [vmem:[%s402] sm:$0xff]
        %v486 = vld [vmem:[%s402 + $0x8] sm:$0xff]
        %v487 = vld [vmem:[%s402 + $0x10] sm:$0xff]
        %v488 = vld [vmem:[%s402 + $0x18] sm:$0xff]
        %v489 = vld [vmem:[%s402 + $0x20] sm:$0xff]
        %v490 = vld [vmem:[%s402 + $0x28] sm:$0xff]
        %v491 = vld [vmem:[%s402 + $0x30] sm:$0xff]
        %v492 = vld [vmem:[%s402 + $0x38] sm:$0xff]
        %v493 = vld [vmem:[%s402 + $0x40] sm:$0xff]
        %v494 = vld [vmem:[%s402 + $0x48] sm:$0xff]
        %v495 = vld [vmem:[%s402 + $0x50] sm:$0xff]
        %v496 = vld [vmem:[%s402 + $0x58] sm:$0xff]
        %v497 = vld [vmem:[%s402 + $0x60] sm:$0xff]
        %v498 = vld [vmem:[%s402 + $0x68] sm:$0xff]
        %v499 = vld [vmem:[%s402 + $0x70] sm:$0xff]
        %v500 = vld [vmem:[%s402 + $0x78] sm:$0xff]
        %501 = vmatprep.subr.mxu0 0.0
        %502 = vmatpush1.msra.mxu0 %v485
        %503 = vmatprep.subr.mxu0 0.0
        %504 = vmatpush1.msra.mxu0 %v486
        %505 = vmatprep.subr.mxu0 0.0
        %506 = vmatpush1.msra.mxu0 %v487
        %507 = vmatprep.subr.mxu0 0.0
        %508 = vmatpush1.msra.mxu0 %v488
        %509 = vmatprep.subr.mxu0 0.0
        %510 = vmatpush1.msra.mxu0 %v489
        %511 = vmatprep.subr.mxu0 0.0
        %512 = vmatpush1.msra.mxu0 %v490
        %513 = vmatprep.subr.mxu0 0.0
        %514 = vmatpush1.msra.mxu0 %v491
        %515 = vmatprep.subr.mxu0 0.0
        %516 = vmatpush1.msra.mxu0 %v492
        %517 = vmatprep.subr.mxu0 0.0
        %518 = vmatpush1.msra.mxu0 %v493
        %519 = vmatprep.subr.mxu0 0.0
        %520 = vmatpush1.msra.mxu0 %v494
        %521 = vmatprep.subr.mxu0 0.0
        %522 = vmatpush1.msra.mxu0 %v495
        %523 = vmatprep.subr.mxu0 0.0
        %524 = vmatpush1.msra.mxu0 %v496
        %525 = vmatprep.subr.mxu0 0.0
        %526 = vmatpush1.msra.mxu0 %v497
        %527 = vmatprep.subr.mxu0 0.0
        %528 = vmatpush1.msra.mxu0 %v498
        %529 = vmatprep.subr.mxu0 0.0
        %530 = vmatpush1.msra.mxu0 %v499
        %531 = vmatprep.subr.mxu0 0.0
        %532 = vmatpush1.msra.mxu0 %v500
        %533 = vmatprep.subr.mxu0 0.0
        %534 = vmatpush1.msra.mxu0 0.0
        %535 = vmatprep.subr.mxu0 0.0
        %536 = vmatpush1.msra.mxu0 0.0
        %537 = vmatprep.subr.mxu0 0.0
        %538 = vmatpush1.msra.mxu0 0.0
        %539 = vmatprep.subr.mxu0 0.0
        %540 = vmatpush1.msra.mxu0 0.0
        %541 = vmatprep.subr.mxu0 0.0
        %542 = vmatpush1.msra.mxu0 0.0
        %543 = vmatprep.subr.mxu0 0.0
        %544 = vmatpush1.msra.mxu0 0.0
        %545 = vmatprep.subr.mxu0 0.0
        %546 = vmatpush1.msra.mxu0 0.0
        %547 = vmatprep.subr.mxu0 0.0
        %548 = vmatpush1.msra.mxu0 0.0
        %549 = vmatprep.subr.mxu0 0.0
        %550 = vmatpush1.msra.mxu0 0.0
        %551 = vmatprep.subr.mxu0 0.0
        %552 = vmatpush1.msra.mxu0 0.0
        %553 = vmatprep.subr.mxu0 0.0
        %554 = vmatpush1.msra.mxu0 0.0
        %555 = vmatprep.subr.mxu0 0.0
        %556 = vmatpush1.msra.mxu0 0.0
        %557 = vmatprep.subr.mxu0 0.0
        %558 = vmatpush1.msra.mxu0 0.0
        %559 = vmatprep.subr.mxu0 0.0
        %560 = vmatpush1.msra.mxu0 0.0
        %561 = vmatprep.subr.mxu0 0.0
        %562 = vmatpush1.msra.mxu0 0.0
        %563 = vmatprep.subr.mxu0 0.0
        %564 = vmatpush1.msra.mxu0 0.0
        %565 = vmatprep.mubr.f32.mxu0 0.0
        %566 = vmatmul.mubr.f32.gmra.mrb[0].mxu0 %v469
        %v567 = vpop.f32.mrb[0].mxu0
        %v568 = vadd.f32 0.0, %v567
        %v569 = vpop.f32.mrb[0].mxu0
        %570 = vmatprep.mubr.f32.mxu0 0.0
        %571 = vmatmul.mubr.f32.gmra.mrb[0].mxu0 %v470
        %v572 = vpop.f32.mrb[0].mxu0
        %v573 = vadd.f32 0.0, %v572
        %v574 = vpop.f32.mrb[0].mxu0
        %575 = vmatprep.mubr.f32.mxu0 0.0
        %576 = vmatmul.mubr.f32.gmra.mrb[0].mxu0 %v471
        %v577 = vpop.f32.mrb[0].mxu0
        %v578 = vadd.f32 0.0, %v577
        %v579 = vpop.f32.mrb[0].mxu0
        %580 = vmatprep.mubr.f32.mxu0 0.0
        %581 = vmatmul.mubr.f32.gmra.mrb[0].mxu0 %v472
        %v582 = vpop.f32.mrb[0].mxu0
        %v583 = vadd.f32 0.0, %v582
        %v584 = vpop.f32.mrb[0].mxu0
        %585 = vmatprep.mubr.f32.mxu0 0.0
        %586 = vmatmul.mubr.f32.gmra.mrb[0].mxu0 %v473
        %v587 = vpop.f32.mrb[0].mxu0
        %v588 = vadd.f32 0.0, %v587
        %v589 = vpop.f32.mrb[0].mxu0
        %590 = vmatprep.mubr.f32.mxu0 0.0
        %591 = vmatmul.mubr.f32.gmra.mrb[0].mxu0 %v474
        %v592 = vpop.f32.mrb[0].mxu0
        %v593 = vadd.f32 0.0, %v592
        %v594 = vpop.f32.mrb[0].mxu0
        %595 = vmatprep.mubr.f32.mxu0 0.0
        %596 = vmatmul.mubr.f32.gmra.mrb[0].mxu0 %v475
        %v597 = vpop.f32.mrb[0].mxu0
        %v598 = vadd.f32 0.0, %v597
        %v599 = vpop.f32.mrb[0].mxu0
        %600 = vmatprep.mubr.f32.mxu0 0.0
        %601 = vmatmul.mubr.f32.gmra.mrb[0].mxu0 %v476
        %v602 = vpop.f32.mrb[0].mxu0
        %v603 = vadd.f32 0.0, %v602
        %v604 = vpop.f32.mrb[0].mxu0
        %605 = vmatprep.mubr.f32.mxu0 0.0
        %606 = vmatmul.mubr.f32.gmra.mrb[0].mxu0 %v477
        %v607 = vpop.f32.mrb[0].mxu0
        %v608 = vadd.f32 0.0, %v607
        %v609 = vpop.f32.mrb[0].mxu0
        %610 = vmatprep.mubr.f32.mxu0 0.0
        %611 = vmatmul.mubr.f32.gmra.mrb[0].mxu0 %v478
        %v612 = vpop.f32.mrb[0].mxu0
        %v613 = vadd.f32 0.0, %v612
        %v614 = vpop.f32.mrb[0].mxu0
        %615 = vmatprep.mubr.f32.mxu0 0.0
        %616 = vmatmul.mubr.f32.gmra.mrb[0].mxu0 %v479
        %v617 = vpop.f32.mrb[0].mxu0
        %v618 = vadd.f32 0.0, %v617
        %v619 = vpop.f32.mrb[0].mxu0
        %620 = vmatprep.mubr.f32.mxu0 0.0
        %621 = vmatmul.mubr.f32.gmra.mrb[0].mxu0 %v480
        %v622 = vpop.f32.mrb[0].mxu0
        %v623 = vadd.f32 0.0, %v622
        %v624 = vpop.f32.mrb[0].mxu0
        %625 = vmatprep.mubr.f32.mxu0 0.0
        %626 = vmatmul.mubr.f32.gmra.mrb[0].mxu0 %v481
        %v627 = vpop.f32.mrb[0].mxu0
        %v628 = vadd.f32 0.0, %v627
        %v629 = vpop.f32.mrb[0].mxu0
        %630 = vmatprep.mubr.f32.mxu0 0.0
        %631 = vmatmul.mubr.f32.gmra.mrb[0].mxu0 %v482
        %v632 = vpop.f32.mrb[0].mxu0
        %v633 = vadd.f32 0.0, %v632
        %v634 = vpop.f32.mrb[0].mxu0
        %635 = vmatprep.mubr.f32.mxu0 0.0
        %636 = vmatmul.mubr.f32.gmra.mrb[0].mxu0 %v483
        %v637 = vpop.f32.mrb[0].mxu0
        %v638 = vadd.f32 0.0, %v637
        %v639 = vpop.f32.mrb[0].mxu0
        %640 = vmatprep.mubr.f32.mxu0 0.0
        %641 = vmatmul.mubr.f32.gmra.mrb[0].mxu0 %v484
        %v642 = vpop.f32.mrb[0].mxu0
        %v643 = vadd.f32 0.0, %v642
        %v644 = vpop.f32.mrb[0].mxu0
        %645 = vdwg.mxu0
        %v646 = vadd.f32 %v437, %v568
        %v647 = vadd.f32 %v438, %v573
        %v648 = vadd.f32 %v439, %v578
        %v649 = vadd.f32 %v440, %v583
        %v650 = vadd.f32 %v441, %v588
        %v651 = vadd.f32 %v442, %v593
        %v652 = vadd.f32 %v443, %v598
        %v653 = vadd.f32 %v444, %v603
        %v654 = vadd.f32 %v445, %v608
        %v655 = vadd.f32 %v446, %v613
        %v656 = vadd.f32 %v447, %v618
        %v657 = vadd.f32 %v448, %v623
        %v658 = vadd.f32 %v449, %v628
        %v659 = vadd.f32 %v450, %v633
        %v660 = vadd.f32 %v451, %v638
        %v661 = vadd.f32 %v452, %v643
        %vm662 = vcmask 31744
        %663 = vst.msk [vmem:[#allocation2] sm:$0xff] %vm662, %v646
        %664 = vst.msk [vmem:[#allocation2 + $0x8] sm:$0xff] %vm662, %v647
        %665 = vst.msk [vmem:[#allocation2 + $0x10] sm:$0xff] %vm662, %v648
        %666 = vst.msk [vmem:[#allocation2 + $0x18] sm:$0xff] %vm662, %v649
        %667 = vst.msk [vmem:[#allocation2 + $0x20] sm:$0xff] %vm662, %v650
        %668 = vst.msk [vmem:[#allocation2 + $0x28] sm:$0xff] %vm662, %v651
        %669 = vst.msk [vmem:[#allocation2 + $0x30] sm:$0xff] %vm662, %v652
        %670 = vst.msk [vmem:[#allocation2 + $0x38] sm:$0xff] %vm662, %v653
        %671 = vst.msk [vmem:[#allocation2 + $0x40] sm:$0xff] %vm662, %v654
        %672 = vst.msk [vmem:[#allocation2 + $0x48] sm:$0xff] %vm662, %v655
        %673 = vst.msk [vmem:[#allocation2 + $0x50] sm:$0xff] %vm662, %v656
        %674 = vst.msk [vmem:[#allocation2 + $0x58] sm:$0xff] %vm662, %v657
        %675 = vst.msk [vmem:[#allocation2 + $0x60] sm:$0xff] %vm662, %v658
        %676 = vst.msk [vmem:[#allocation2 + $0x68] sm:$0xff] %vm662, %v659
        %677 = vst.msk [vmem:[#allocation2 + $0x70] sm:$0xff] %vm662, %v660
        %678 = vst.msk [vmem:[#allocation2 + $0x78] sm:$0xff] %vm662, %v661
        %p679 = scmp.eq.s32.totalorder %s22, 1
        // Predicated region
        $region90: #{tpu_custom_call.1} parent=80 // pred_check
          %p680 = pneg %p679
        $region91: #{tpu_custom_call.1} parent=80 // pred_check_branch
          %682 = sbr.rel (%p680) target = $region93
        $region92: #{tpu_custom_call.1} parent=80 // pred_region
          %v683 = vld [vmem:[#allocation2] sm:$0xff]
          %v684 = vld [vmem:[#allocation2 + $0x8] sm:$0xff]
          %v685 = vld [vmem:[#allocation2 + $0x10] sm:$0xff]
          %v686 = vld [vmem:[#allocation2 + $0x18] sm:$0xff]
          %v687 = vld [vmem:[#allocation2 + $0x20] sm:$0xff]
          %v688 = vld [vmem:[#allocation2 + $0x28] sm:$0xff]
          %v689 = vld [vmem:[#allocation2 + $0x30] sm:$0xff]
          %v690 = vld [vmem:[#allocation2 + $0x38] sm:$0xff]
          %v691 = vld [vmem:[#allocation2 + $0x40] sm:$0xff]
          %v692 = vld [vmem:[#allocation2 + $0x48] sm:$0xff]
          %v693 = vld [vmem:[#allocation2 + $0x50] sm:$0xff]
          %v694 = vld [vmem:[#allocation2 + $0x58] sm:$0xff]
          %v695 = vld [vmem:[#allocation2 + $0x60] sm:$0xff]
          %v696 = vld [vmem:[#allocation2 + $0x68] sm:$0xff]
          %v697 = vld [vmem:[#allocation2 + $0x70] sm:$0xff]
          %v698 = vld [vmem:[#allocation2 + $0x78] sm:$0xff]
          %v699 = vld [vmem:[%s3] sm:$0xf]
          %v700 = vld [vmem:[%s408] sm:$0xff]
          %v701 = vld [vmem:[%s408 + $0x8] sm:$0xff]
          %v702 = vld [vmem:[%s408 + $0x10] sm:$0xff]
          %v703 = vld [vmem:[%s408 + $0x18] sm:$0xff]
          %v704 = vld [vmem:[%s408 + $0x20] sm:$0xff]
          %v705 = vld [vmem:[%s408 + $0x28] sm:$0xff]
          %v706 = vld [vmem:[%s408 + $0x30] sm:$0xff]
          %v707 = vld [vmem:[%s408 + $0x38] sm:$0xff]
          %v708 = vld [vmem:[%s408 + $0x40] sm:$0xff]
          %v709 = vld [vmem:[%s408 + $0x48] sm:$0xff]
          %v710 = vld [vmem:[%s408 + $0x50] sm:$0xff]
          %v711 = vld [vmem:[%s408 + $0x58] sm:$0xff]
          %v712 = vld [vmem:[%s408 + $0x60] sm:$0xff]
          %v713 = vld [vmem:[%s408 + $0x68] sm:$0xff]
          %v714 = vld [vmem:[%s408 + $0x70] sm:$0xff]
          %v715 = vld [vmem:[%s408 + $0x78] sm:$0xff]
          %v716 = vld [vmem:[%s4] sm:$0xf]
          %v718 = vsel %vm662, %v700, 0
          %v721 = vsel %vm662, %v701, 0
          %v724 = vsel %vm662, %v702, 0
          %v727 = vsel %vm662, %v703, 0
          %v730 = vsel %vm662, %v704, 0
          %v733 = vsel %vm662, %v705, 0
          %v736 = vsel %vm662, %v706, 0
          %v739 = vsel %vm662, %v707, 0
          %v742 = vsel %vm662, %v708, 0
          %v745 = vsel %vm662, %v709, 0
          %v748 = vsel %vm662, %v710, 0
          %v751 = vsel %vm662, %v711, 0
          %v754 = vsel %vm662, %v712, 0
          %v757 = vsel %vm662, %v713, 0
          %v760 = vsel %vm662, %v714, 0
          %v763 = vsel %vm662, %v715, 0
          %vm765 = vcmask 1043456
          %v767 = vsel %vm765, %v716, 0
          %769 = vmatprep.subr.mxu0 0.0
          %770 = vmatpush1.msra.mxu0 %v767
          %771 = vmatprep.subr.mxu0 0.0
          %772 = vmatpush1.msra.mxu0 0.0
          %773 = vmatprep.subr.mxu0 0.0
          %774 = vmatpush1.msra.mxu0 0.0
          %775 = vmatprep.subr.mxu0 0.0
          %776 = vmatpush1.msra.mxu0 0.0
          %777 = vmatprep.subr.mxu0 0.0
          %778 = vmatpush1.msra.mxu0 0.0
          %779 = vmatprep.subr.mxu0 0.0
          %780 = vmatpush1.msra.mxu0 0.0
          %781 = vmatprep.subr.mxu0 0.0
          %782 = vmatpush1.msra.mxu0 0.0
          %783 = vmatprep.subr.mxu0 0.0
          %784 = vmatpush1.msra.mxu0 0.0
          %785 = vmatprep.subr.mxu0 0.0
          %786 = vmatpush1.msra.mxu0 0.0
          %787 = vmatprep.subr.mxu0 0.0
          %788 = vmatpush1.msra.mxu0 0.0
          %789 = vmatprep.subr.mxu0 0.0
          %790 = vmatpush1.msra.mxu0 0.0
          %791 = vmatprep.subr.mxu0 0.0
          %792 = vmatpush1.msra.mxu0 0.0
          %793 = vmatprep.subr.mxu0 0.0
          %794 = vmatpush1.msra.mxu0 0.0
          %795 = vmatprep.subr.mxu0 0.0
          %796 = vmatpush1.msra.mxu0 0.0
          %797 = vmatprep.subr.mxu0 0.0
          %798 = vmatpush1.msra.mxu0 0.0
          %799 = vmatprep.subr.mxu0 0.0
          %800 = vmatpush1.msra.mxu0 0.0
          %801 = vmatprep.subr.mxu0 0.0
          %802 = vmatpush1.msra.mxu0 0.0
          %803 = vmatprep.subr.mxu0 0.0
          %804 = vmatpush1.msra.mxu0 0.0
          %805 = vmatprep.subr.mxu0 0.0
          %806 = vmatpush1.msra.mxu0 0.0
          %807 = vmatprep.subr.mxu0 0.0
          %808 = vmatpush1.msra.mxu0 0.0
          %809 = vmatprep.subr.mxu0 0.0
          %810 = vmatpush1.msra.mxu0 0.0
          %811 = vmatprep.subr.mxu0 0.0
          %812 = vmatpush1.msra.mxu0 0.0
          %813 = vmatprep.subr.mxu0 0.0
          %814 = vmatpush1.msra.mxu0 0.0
          %815 = vmatprep.subr.mxu0 0.0
          %816 = vmatpush1.msra.mxu0 0.0
          %817 = vmatprep.subr.mxu0 0.0
          %818 = vmatpush1.msra.mxu0 0.0
          %819 = vmatprep.subr.mxu0 0.0
          %820 = vmatpush1.msra.mxu0 0.0
          %821 = vmatprep.subr.mxu0 0.0
          %822 = vmatpush1.msra.mxu0 0.0
          %823 = vmatprep.subr.mxu0 0.0
          %824 = vmatpush1.msra.mxu0 0.0
          %825 = vmatprep.subr.mxu0 0.0
          %826 = vmatpush1.msra.mxu0 0.0
          %827 = vmatprep.subr.mxu0 0.0
          %828 = vmatpush1.msra.mxu0 0.0
          %829 = vmatprep.subr.mxu0 0.0
          %830 = vmatpush1.msra.mxu0 0.0
          %831 = vmatprep.subr.mxu0 0.0
          %832 = vmatpush1.msra.mxu0 0.0
          %833 = vmatprep.mubr.f32.mxu0 0.0
          %834 = vmatmul.mubr.f32.gmra.mrb[0].mxu0 %v718
          %v835 = vpop.f32.mrb[0].mxu0
          %v836 = vadd.f32 0.0, %v835
          %v837 = vpop.f32.mrb[0].mxu0
          %838 = vmatprep.mubr.f32.mxu0 0.0
          %839 = vmatmul.mubr.f32.gmra.mrb[0].mxu0 %v721
          %v840 = vpop.f32.mrb[0].mxu0
          %v841 = vadd.f32 0.0, %v840
          %v842 = vpop.f32.mrb[0].mxu0
          %843 = vmatprep.mubr.f32.mxu0 0.0
          %844 = vmatmul.mubr.f32.gmra.mrb[0].mxu0 %v724
          %v845 = vpop.f32.mrb[0].mxu0
          %v846 = vadd.f32 0.0, %v845
          %v847 = vpop.f32.mrb[0].mxu0
          %848 = vmatprep.mubr.f32.mxu0 0.0
          %849 = vmatmul.mubr.f32.gmra.mrb[0].mxu0 %v727
          %v850 = vpop.f32.mrb[0].mxu0
          %v851 = vadd.f32 0.0, %v850
          %v852 = vpop.f32.mrb[0].mxu0
          %853 = vmatprep.mubr.f32.mxu0 0.0
          %854 = vmatmul.mubr.f32.gmra.mrb[0].mxu0 %v730
          %v855 = vpop.f32.mrb[0].mxu0
          %v856 = vadd.f32 0.0, %v855
          %v857 = vpop.f32.mrb[0].mxu0
          %858 = vmatprep.mubr.f32.mxu0 0.0
          %859 = vmatmul.mubr.f32.gmra.mrb[0].mxu0 %v733
          %v860 = vpop.f32.mrb[0].mxu0
          %v861 = vadd.f32 0.0, %v860
          %v862 = vpop.f32.mrb[0].mxu0
          %863 = vmatprep.mubr.f32.mxu0 0.0
          %864 = vmatmul.mubr.f32.gmra.mrb[0].mxu0 %v736
          %v865 = vpop.f32.mrb[0].mxu0
          %v866 = vadd.f32 0.0, %v865
          %v867 = vpop.f32.mrb[0].mxu0
          %868 = vmatprep.mubr.f32.mxu0 0.0
          %869 = vmatmul.mubr.f32.gmra.mrb[0].mxu0 %v739
          %v870 = vpop.f32.mrb[0].mxu0
          %v871 = vadd.f32 0.0, %v870
          %v872 = vpop.f32.mrb[0].mxu0
          %873 = vmatprep.mubr.f32.mxu0 0.0
          %874 = vmatmul.mubr.f32.gmra.mrb[0].mxu0 %v742
          %v875 = vpop.f32.mrb[0].mxu0
          %v876 = vadd.f32 0.0, %v875
          %v877 = vpop.f32.mrb[0].mxu0
          %878 = vmatprep.mubr.f32.mxu0 0.0
          %879 = vmatmul.mubr.f32.gmra.mrb[0].mxu0 %v745
          %v880 = vpop.f32.mrb[0].mxu0
          %v881 = vadd.f32 0.0, %v880
          %v882 = vpop.f32.mrb[0].mxu0
          %883 = vmatprep.mubr.f32.mxu0 0.0
          %884 = vmatmul.mubr.f32.gmra.mrb[0].mxu0 %v748
          %v885 = vpop.f32.mrb[0].mxu0
          %v886 = vadd.f32 0.0, %v885
          %v887 = vpop.f32.mrb[0].mxu0
          %888 = vmatprep.mubr.f32.mxu0 0.0
          %889 = vmatmul.mubr.f32.gmra.mrb[0].mxu0 %v751
          %v890 = vpop.f32.mrb[0].mxu0
          %v891 = vadd.f32 0.0, %v890
          %v892 = vpop.f32.mrb[0].mxu0
          %893 = vmatprep.mubr.f32.mxu0 0.0
          %894 = vmatmul.mubr.f32.gmra.mrb[0].mxu0 %v754
          %v895 = vpop.f32.mrb[0].mxu0
          %v896 = vadd.f32 0.0, %v895
          %v897 = vpop.f32.mrb[0].mxu0
          %898 = vmatprep.mubr.f32.mxu0 0.0
          %899 = vmatmul.mubr.f32.gmra.mrb[0].mxu0 %v757
          %v900 = vpop.f32.mrb[0].mxu0
          %v901 = vadd.f32 0.0, %v900
          %v902 = vpop.f32.mrb[0].mxu0
          %903 = vmatprep.mubr.f32.mxu0 0.0
          %904 = vmatmul.mubr.f32.gmra.mrb[0].mxu0 %v760
          %v905 = vpop.f32.mrb[0].mxu0
          %v906 = vadd.f32 0.0, %v905
          %v907 = vpop.f32.mrb[0].mxu0
          %908 = vmatprep.mubr.f32.mxu0 0.0
          %909 = vmatmul.mubr.f32.gmra.mrb[0].mxu0 %v763
          %v910 = vpop.f32.mrb[0].mxu0
          %v911 = vadd.f32 0.0, %v910
          %v912 = vpop.f32.mrb[0].mxu0
          %913 = vdwg.mxu0
          %v915 = vsel %vm662, %v683, 0
          %v918 = vsel %vm662, %v684, 0
          %v921 = vsel %vm662, %v685, 0
          %v924 = vsel %vm662, %v686, 0
          %v927 = vsel %vm662, %v687, 0
          %v930 = vsel %vm662, %v688, 0
          %v933 = vsel %vm662, %v689, 0
          %v936 = vsel %vm662, %v690, 0
          %v939 = vsel %vm662, %v691, 0
          %v942 = vsel %vm662, %v692, 0
          %v945 = vsel %vm662, %v693, 0
          %v948 = vsel %vm662, %v694, 0
          %v951 = vsel %vm662, %v695, 0
          %v954 = vsel %vm662, %v696, 0
          %v957 = vsel %vm662, %v697, 0
          %v960 = vsel %vm662, %v698, 0
          %v963 = vsel %vm765, %v699, 0
          %965 = vmatprep.subr.mxu0 0.0
          %966 = vmatpush1.msra.mxu0 %v963
          %967 = vmatprep.subr.mxu0 0.0
          %968 = vmatpush1.msra.mxu0 0.0
          %969 = vmatprep.subr.mxu0 0.0
          %970 = vmatpush1.msra.mxu0 0.0
          %971 = vmatprep.subr.mxu0 0.0
          %972 = vmatpush1.msra.mxu0 0.0
          %973 = vmatprep.subr.mxu0 0.0
          %974 = vmatpush1.msra.mxu0 0.0
          %975 = vmatprep.subr.mxu0 0.0
          %976 = vmatpush1.msra.mxu0 0.0
          %977 = vmatprep.subr.mxu0 0.0
          %978 = vmatpush1.msra.mxu0 0.0
          %979 = vmatprep.subr.mxu0 0.0
          %980 = vmatpush1.msra.mxu0 0.0
          %981 = vmatprep.subr.mxu0 0.0
          %982 = vmatpush1.msra.mxu0 0.0
          %983 = vmatprep.subr.mxu0 0.0
          %984 = vmatpush1.msra.mxu0 0.0
          %985 = vmatprep.subr.mxu0 0.0
          %986 = vmatpush1.msra.mxu0 0.0
          %987 = vmatprep.subr.mxu0 0.0
          %988 = vmatpush1.msra.mxu0 0.0
          %989 = vmatprep.subr.mxu0 0.0
          %990 = vmatpush1.msra.mxu0 0.0
          %991 = vmatprep.subr.mxu0 0.0
          %992 = vmatpush1.msra.mxu0 0.0
          %993 = vmatprep.subr.mxu0 0.0
          %994 = vmatpush1.msra.mxu0 0.0
          %995 = vmatprep.subr.mxu0 0.0
          %996 = vmatpush1.msra.mxu0 0.0
          %997 = vmatprep.subr.mxu0 0.0
          %998 = vmatpush1.msra.mxu0 0.0
          %999 = vmatprep.subr.mxu0 0.0
          %1000 = vmatpush1.msra.mxu0 0.0
          %1001 = vmatprep.subr.mxu0 0.0
          %1002 = vmatpush1.msra.mxu0 0.0
          %1003 = vmatprep.subr.mxu0 0.0
          %1004 = vmatpush1.msra.mxu0 0.0
          %1005 = vmatprep.subr.mxu0 0.0
          %1006 = vmatpush1.msra.mxu0 0.0
          %1007 = vmatprep.subr.mxu0 0.0
          %1008 = vmatpush1.msra.mxu0 0.0
          %1009 = vmatprep.subr.mxu0 0.0
          %1010 = vmatpush1.msra.mxu0 0.0
          %1011 = vmatprep.subr.mxu0 0.0
          %1012 = vmatpush1.msra.mxu0 0.0
          %1013 = vmatprep.subr.mxu0 0.0
          %1014 = vmatpush1.msra.mxu0 0.0
          %1015 = vmatprep.subr.mxu0 0.0
          %1016 = vmatpush1.msra.mxu0 0.0
          %1017 = vmatprep.subr.mxu0 0.0
          %1018 = vmatpush1.msra.mxu0 0.0
          %1019 = vmatprep.subr.mxu0 0.0
          %1020 = vmatpush1.msra.mxu0 0.0
          %1021 = vmatprep.subr.mxu0 0.0
          %1022 = vmatpush1.msra.mxu0 0.0
          %1023 = vmatprep.subr.mxu0 0.0
          %1024 = vmatpush1.msra.mxu0 0.0
          %1025 = vmatprep.subr.mxu0 0.0
          %1026 = vmatpush1.msra.mxu0 0.0
          %1027 = vmatprep.subr.mxu0 0.0
          %1028 = vmatpush1.msra.mxu0 0.0
          %1029 = vmatprep.mubr.f32.mxu0 0.0
          %1030 = vmatmul.mubr.f32.gmra.mrb[0].mxu0 %v915
          %v1031 = vpop.f32.mrb[0].mxu0
          %v1032 = vadd.f32 %v836, %v1031
          %v1033 = vpop.f32.mrb[0].mxu0
          %1034 = vmatprep.mubr.f32.mxu0 0.0
          %1035 = vmatmul.mubr.f32.gmra.mrb[0].mxu0 %v918
          %v1036 = vpop.f32.mrb[0].mxu0
          %v1037 = vadd.f32 %v841, %v1036
          %v1038 = vpop.f32.mrb[0].mxu0
          %1039 = vmatprep.mubr.f32.mxu0 0.0
          %1040 = vmatmul.mubr.f32.gmra.mrb[0].mxu0 %v921
          %v1041 = vpop.f32.mrb[0].mxu0
          %v1042 = vadd.f32 %v846, %v1041
          %v1043 = vpop.f32.mrb[0].mxu0
          %1044 = vmatprep.mubr.f32.mxu0 0.0
          %1045 = vmatmul.mubr.f32.gmra.mrb[0].mxu0 %v924
          %v1046 = vpop.f32.mrb[0].mxu0
          %v1047 = vadd.f32 %v851, %v1046
          %v1048 = vpop.f32.mrb[0].mxu0
          %1049 = vmatprep.mubr.f32.mxu0 0.0
          %1050 = vmatmul.mubr.f32.gmra.mrb[0].mxu0 %v927
          %v1051 = vpop.f32.mrb[0].mxu0
          %v1052 = vadd.f32 %v856, %v1051
          %v1053 = vpop.f32.mrb[0].mxu0
          %1054 = vmatprep.mubr.f32.mxu0 0.0
          %1055 = vmatmul.mubr.f32.gmra.mrb[0].mxu0 %v930
          %v1056 = vpop.f32.mrb[0].mxu0
          %v1057 = vadd.f32 %v861, %v1056
          %v1058 = vpop.f32.mrb[0].mxu0
          %1059 = vmatprep.mubr.f32.mxu0 0.0
          %1060 = vmatmul.mubr.f32.gmra.mrb[0].mxu0 %v933
          %v1061 = vpop.f32.mrb[0].mxu0
          %v1062 = vadd.f32 %v866, %v1061
          %v1063 = vpop.f32.mrb[0].mxu0
          %1064 = vmatprep.mubr.f32.mxu0 0.0
          %1065 = vmatmul.mubr.f32.gmra.mrb[0].mxu0 %v936
          %v1066 = vpop.f32.mrb[0].mxu0
          %v1067 = vadd.f32 %v871, %v1066
          %v1068 = vpop.f32.mrb[0].mxu0
          %1069 = vmatprep.mubr.f32.mxu0 0.0
          %1070 = vmatmul.mubr.f32.gmra.mrb[0].mxu0 %v939
          %v1071 = vpop.f32.mrb[0].mxu0
          %v1072 = vadd.f32 %v876, %v1071
          %v1073 = vpop.f32.mrb[0].mxu0
          %1074 = vmatprep.mubr.f32.mxu0 0.0
          %1075 = vmatmul.mubr.f32.gmra.mrb[0].mxu0 %v942
          %v1076 = vpop.f32.mrb[0].mxu0
          %v1077 = vadd.f32 %v881, %v1076
          %v1078 = vpop.f32.mrb[0].mxu0
          %1079 = vmatprep.mubr.f32.mxu0 0.0
          %1080 = vmatmul.mubr.f32.gmra.mrb[0].mxu0 %v945
          %v1081 = vpop.f32.mrb[0].mxu0
          %v1082 = vadd.f32 %v886, %v1081
          %v1083 = vpop.f32.mrb[0].mxu0
          %1084 = vmatprep.mubr.f32.mxu0 0.0
          %1085 = vmatmul.mubr.f32.gmra.mrb[0].mxu0 %v948
          %v1086 = vpop.f32.mrb[0].mxu0
          %v1087 = vadd.f32 %v891, %v1086
          %v1088 = vpop.f32.mrb[0].mxu0
          %1089 = vmatprep.mubr.f32.mxu0 0.0
          %1090 = vmatmul.mubr.f32.gmra.mrb[0].mxu0 %v951
          %v1091 = vpop.f32.mrb[0].mxu0
          %v1092 = vadd.f32 %v896, %v1091
          %v1093 = vpop.f32.mrb[0].mxu0
          %1094 = vmatprep.mubr.f32.mxu0 0.0
          %1095 = vmatmul.mubr.f32.gmra.mrb[0].mxu0 %v954
          %v1096 = vpop.f32.mrb[0].mxu0
          %v1097 = vadd.f32 %v901, %v1096
          %v1098 = vpop.f32.mrb[0].mxu0
          %1099 = vmatprep.mubr.f32.mxu0 0.0
          %1100 = vmatmul.mubr.f32.gmra.mrb[0].mxu0 %v957
          %v1101 = vpop.f32.mrb[0].mxu0
          %v1102 = vadd.f32 %v906, %v1101
          %v1103 = vpop.f32.mrb[0].mxu0
          %1104 = vmatprep.mubr.f32.mxu0 0.0
          %1105 = vmatmul.mubr.f32.gmra.mrb[0].mxu0 %v960
          %v1106 = vpop.f32.mrb[0].mxu0
          %v1107 = vadd.f32 %v911, %v1106
          %v1108 = vpop.f32.mrb[0].mxu0
          %1109 = vdwg.mxu0
          %v1110 = vld [vmem:[%s5] sm:$0x1]
          %v1112 = vlaneseq
          %v1113 = vshrl.u32 %v1112, 7
          %v1114 = vsub.s32 0, %v1113
          %v1115 = vrot.slane %v1110, %v1114
          %v1117 = vadd.f32 %v1032, %v1115
          %v1118 = vadd.f32 %v1037, %v1115
          %v1119 = vadd.f32 %v1042, %v1115
          %v1120 = vadd.f32 %v1047, %v1115
          %v1121 = vadd.f32 %v1052, %v1115
          %v1122 = vadd.f32 %v1057, %v1115
          %v1123 = vadd.f32 %v1062, %v1115
          %v1124 = vadd.f32 %v1067, %v1115
          %v1125 = vadd.f32 %v1072, %v1115
          %v1126 = vadd.f32 %v1077, %v1115
          %v1127 = vadd.f32 %v1082, %v1115
          %v1128 = vadd.f32 %v1087, %v1115
          %v1129 = vadd.f32 %v1092, %v1115
          %v1130 = vadd.f32 %v1097, %v1115
          %v1131 = vadd.f32 %v1102, %v1115
          %v1132 = vadd.f32 %v1107, %v1115
          %v1133 = vmax.f32 %v1117, 0.0
          %v1134 = vmax.f32 %v1118, 0.0
          %v1135 = vmax.f32 %v1119, 0.0
          %v1136 = vmax.f32 %v1120, 0.0
          %v1137 = vmax.f32 %v1121, 0.0
          %v1138 = vmax.f32 %v1122, 0.0
          %v1139 = vmax.f32 %v1123, 0.0
          %v1140 = vmax.f32 %v1124, 0.0
          %v1141 = vmax.f32 %v1125, 0.0
          %v1142 = vmax.f32 %v1126, 0.0
          %v1143 = vmax.f32 %v1127, 0.0
          %v1144 = vmax.f32 %v1128, 0.0
          %v1145 = vmax.f32 %v1129, 0.0
          %v1146 = vmax.f32 %v1130, 0.0
          %v1147 = vmax.f32 %v1131, 0.0
          %v1148 = vmax.f32 %v1132, 0.0
          %vm1149 = vcmask 261120
          %1150 = vst.msk [vmem:[%s414] sm:$0xff] %vm1149, %v1133
          %1151 = vst.msk [vmem:[%s414 + $0x8] sm:$0xff] %vm1149, %v1134
          %1152 = vst.msk [vmem:[%s414 + $0x10] sm:$0xff] %vm1149, %v1135
          %1153 = vst.msk [vmem:[%s414 + $0x18] sm:$0xff] %vm1149, %v1136
          %1154 = vst.msk [vmem:[%s414 + $0x20] sm:$0xff] %vm1149, %v1137
          %1155 = vst.msk [vmem:[%s414 + $0x28] sm:$0xff] %vm1149, %v1138
          %1156 = vst.msk [vmem:[%s414 + $0x30] sm:$0xff] %vm1149, %v1139
          %1157 = vst.msk [vmem:[%s414 + $0x38] sm:$0xff] %vm1149, %v1140
          %1158 = vst.msk [vmem:[%s414 + $0x40] sm:$0xff] %vm1149, %v1141
          %1159 = vst.msk [vmem:[%s414 + $0x48] sm:$0xff] %vm1149, %v1142
          %1160 = vst.msk [vmem:[%s414 + $0x50] sm:$0xff] %vm1149, %v1143
          %1161 = vst.msk [vmem:[%s414 + $0x58] sm:$0xff] %vm1149, %v1144
          %1162 = vst.msk [vmem:[%s414 + $0x60] sm:$0xff] %vm1149, %v1145
          %1163 = vst.msk [vmem:[%s414 + $0x68] sm:$0xff] %vm1149, %v1146
          %1164 = vst.msk [vmem:[%s414 + $0x70] sm:$0xff] %vm1149, %v1147
          %1165 = vst.msk [vmem:[%s414 + $0x78] sm:$0xff] %vm1149, %v1148
        $region93: #{tpu_custom_call.1} parent=80 // pred_fallthru
          _
        %s1166 = smul.u32 16, %s21
        %p1167 = scmp.lt.s32.totalorder %s1166, 31
        %s1168 = scalar_select %p1167, %s1166, 31
        %s1169 = smul.addr %s1168, 8
        %s1170 = scalar_lea.vmem %s6, %s1169
        // Predicated region
        $region94: #{tpu_custom_call.1} parent=80 // pred_check
          %p1171 = pneg %p190
        $region95: #{tpu_custom_call.1} parent=80 // pred_check_branch
          %1173 = sbr.rel (%p1171) target = $region97
        $region96: #{tpu_custom_call.1} parent=80 // pred_region
          %s1174 = smul.u32 16, %s21
        $region97: #{tpu_custom_call.1} parent=80 // pred_fallthru
          _
      $region81: #{tpu_custom_call.1} parent=5 // pred_fallthru
        _
      %p1175 = scmp.le.s32.totalorder 2, %s12
      // Predicated region
      $region98: #{tpu_custom_call.1} parent=5 // pred_check
        %p1176 = pneg %p1175
      $region99: #{tpu_custom_call.1} parent=5 // pred_check_branch
        %1178 = sbr.rel (%p1176) target = $region101
      $region100: #{tpu_custom_call.1} parent=5 // pred_region
        %s1179 = ssub.s32 %s12, 2
        // Predicated region
        $region102: #{tpu_custom_call.1} parent=100 // pred_check
          %p1180 = pneg %p196
        $region103: #{tpu_custom_call.1} parent=100 // pred_check_branch
          %1182 = sbr.rel (%p1180) target = $region105
        $region104: #{tpu_custom_call.1} parent=100 // pred_region
          %s1183 = smul.u32 16, %s23
          %p1184 = scmp.lt.s32.totalorder %s1183, 31
          %s1185 = scalar_select %p1184, %s1183, 31
          %s1186 = smul.addr %s1185, 8
          %s1187 = scalar_lea.vmem %s6, %s1186
        $region105: #{tpu_custom_call.1} parent=100 // pred_fallthru
          _
      $region101: #{tpu_custom_call.1} parent=5 // pred_fallthru
        _
    $region6: #{tpu_custom_call.1} parent=1 // loop_footer
      %s16 = sadd.s32 1, %s12
    $region7: #{tpu_custom_call.1} parent=1 // loop_footer_branch
      %11 = sbr.rel target = $region3
    $region8: #{tpu_custom_call.1} parent=1 // loop_exit
      _

</llo_original>
